<compile_context>
chip_gen: v6e
topology: v6e:2x2x1
jax: 0.10.0
libtpu: 0.0.40
codegen_flags: <defaults>
</compile_context>

<pallas_src>
import jax
import jax.numpy as jnp
import numpy as np
from jax import lax
from jax.experimental import pallas as pl
from jax.experimental.pallas import tpu as pltpu


# ----------------------------------------------------------------------------
# Wrapper-side glue (layout / linear resampling / im2col) — plain JAX.
# ----------------------------------------------------------------------------
def _round_up(x, m):
    return (x + m - 1) // m * m


def _bilinear_up2_matrix(n_in):
    """(2*n_in, n_in) interpolation matrix equal to
    nn.UpsamplingBilinear2d(scale_factor=2) (align_corners=True) along one axis."""
    n_out = 2 * n_in
    if n_in == 1:
        return jnp.ones((n_out, 1), jnp.float32)
    src = jnp.arange(n_out, dtype=jnp.float32) * (n_in - 1) / (n_out - 1)
    lo = jnp.clip(jnp.floor(src).astype(jnp.int32), 0, n_in - 2)
    w = src - lo.astype(jnp.float32)
    rows = jnp.arange(n_out)
    mat = jnp.zeros((n_out, n_in), jnp.float32)
    mat = mat.at[rows, lo].add(1.0 - w)
    mat = mat.at[rows, lo + 1].add(w)
    return mat


def _upsample_bilinear2x_nhwc(x):
    _, h, w, _ = x.shape
    uh = _bilinear_up2_matrix(h)
    uw = _bilinear_up2_matrix(w)
    y = jnp.einsum('oh,bhwc->bowc', uh, x)
    y = jnp.einsum('pw,bowc->bopc', uw, y)
    return y


def _im2col_3x3(x):
    """x: (B, H, W, C) -> patches (B*H*W, 9*C) for a 3x3 / pad=1 / stride=1 conv."""
    b, h, w, c = x.shape
    xp = jnp.pad(x, ((0, 0), (1, 1), (1, 1), (0, 0)))
    cols = []
    for dy in range(3):
        for dx in range(3):
            cols.append(xp[:, dy:dy + h, dx:dx + w, :])
    patches = jnp.concatenate(cols, axis=-1)            # (B, H, W, 9*C)
    return patches.reshape(b * h * w, 9 * c)


def _conv3x3_weight_matrix(w_oihw):
    """(Cout, Cin, 3, 3) OIHW -> (9*Cin, Cout) matching _im2col_3x3 feature order."""
    cout = w_oihw.shape[0]
    return jnp.transpose(w_oihw, (2, 3, 1, 0)).reshape(-1, cout)


def _fold_bn(gamma, beta, mean, var, eps):
    scale = gamma / jnp.sqrt(var + eps)
    shift = beta - mean * scale
    return (scale.reshape(1, -1).astype(jnp.float32),
            shift.reshape(1, -1).astype(jnp.float32))


# ----------------------------------------------------------------------------
# Pallas kernels.
# ----------------------------------------------------------------------------
def _gemm_bn_relu_kernel(p_ref, w_ref, scale_ref, shift_ref, o_ref):
    # p_ref: (TM, K) bf16 im2col patches; w_ref: (K, Cout) bf16.
    acc = jnp.dot(p_ref[...], w_ref[...], preferred_element_type=jnp.float32)
    y = jnp.maximum(acc * scale_ref[...] + shift_ref[...], 0.0)
    o_ref[...] = y.astype(o_ref.dtype)


def _gemm_bn_relu_1x1_kernel(p_ref, w_ref, scale_ref, shift_ref,
                             wout_ref, bout_ref, z_ref, o_ref):
    # conv2 (as GEMM) + folded BN + ReLU, then fused 1x1 "out" conv on the tile.
    acc = jnp.dot(p_ref[...], w_ref[...], preferred_element_type=jnp.float32)
    z = jnp.maximum(acc * scale_ref[...] + shift_ref[...], 0.0)
    z_ref[...] = z.astype(z_ref.dtype)
    o = jnp.dot(z, wout_ref[...], preferred_element_type=jnp.float32) + bout_ref[...]
    o_ref[...] = o.astype(o_ref.dtype)


def _conv_bn_relu_gemm(patches, w, scale, shift, out_dtype, tm):
    mp, k = patches.shape
    cout = w.shape[1]
    return pl.pallas_call(
        _gemm_bn_relu_kernel,
        out_shape=jax.ShapeDtypeStruct((mp, cout), out_dtype),
        grid=(mp // tm,),
        in_specs=[
            pl.BlockSpec((tm, k), lambda m: (m, 0)),
            pl.BlockSpec((k, cout), lambda m: (0, 0)),
            pl.BlockSpec((1, cout), lambda m: (0, 0)),
            pl.BlockSpec((1, cout), lambda m: (0, 0)),
        ],
        out_specs=pl.BlockSpec((tm, cout), lambda m: (m, 0)),
        compiler_params=pltpu.CompilerParams(dimension_semantics=("parallel",)),
    )(patches, w, scale, shift)


def _conv_bn_relu_plus_1x1_gemm(patches, w, scale, shift, wout, bout, tm):
    mp, k = patches.shape
    cout = w.shape[1]
    pred = wout.shape[1]
    return pl.pallas_call(
        _gemm_bn_relu_1x1_kernel,
        out_shape=(jax.ShapeDtypeStruct((mp, cout), jnp.float32),
                   jax.ShapeDtypeStruct((mp, pred), jnp.float32)),
        grid=(mp // tm,),
        in_specs=[
            pl.BlockSpec((tm, k), lambda m: (m, 0)),
            pl.BlockSpec((k, cout), lambda m: (0, 0)),
            pl.BlockSpec((1, cout), lambda m: (0, 0)),
            pl.BlockSpec((1, cout), lambda m: (0, 0)),
            pl.BlockSpec((cout, pred), lambda m: (0, 0)),
            pl.BlockSpec((1, pred), lambda m: (0, 0)),
        ],
        out_specs=(pl.BlockSpec((tm, cout), lambda m: (m, 0)),
                   pl.BlockSpec((tm, pred), lambda m: (m, 0))),
        compiler_params=pltpu.CompilerParams(dimension_semantics=("parallel",)),
    )(patches, w, scale, shift, wout, bout)


# ----------------------------------------------------------------------------
# PSDB_block forward.
# ----------------------------------------------------------------------------
def psdb_block_forward(z, skip,
                       conv1_w, bn1_gamma, bn1_beta, bn1_mean, bn1_var,
                       conv2_w, bn2_gamma, bn2_beta, bn2_mean, bn2_var,
                       out_w, out_b, eps=1e-5, tm=256):
    """z: (B, Cin, H, W) NCHW, skip: (B, Cskip, 2H, 2W) NCHW.
    Returns (z_out, out, semantic_out) matching PSDB_block.forward
    with uncertain_map=None / last_out=None."""
    b, _, h, w = z.shape
    h2, w2 = 2 * h, 2 * w
    c_mid = conv1_w.shape[0]
    pred = out_w.shape[0]

    # --- wrapper-side glue: upsample (align_corners=True), concat, im2col ---
    x = _upsample_bilinear2x_nhwc(jnp.transpose(z, (0, 2, 3, 1)).astype(jnp.float32))
    if skip is not None:
        skip_nhwc = jnp.transpose(skip, (0, 2, 3, 1)).astype(jnp.float32)
        x = jnp.concatenate([x, skip_nhwc], axis=-1)       # (B, H2, W2, Cin+Cskip)

    m = b * h2 * w2
    mp = _round_up(m, tm)

    # conv1 as a single lane-dense bf16 GEMM.
    c1_in = x.shape[-1]
    k1 = 9 * c1_in
    k1p = _round_up(k1, 128)
    p1 = jnp.pad(_im2col_3x3(x), ((0, mp - m), (0, k1p - k1))).astype(jnp.bfloat16)
    w1 = jnp.pad(_conv3x3_weight_matrix(conv1_w.astype(jnp.float32)),
                 ((0, k1p - k1), (0, 0))).astype(jnp.bfloat16)
    s1, sh1 = _fold_bn(bn1_gamma, bn1_beta, bn1_mean, bn1_var, eps)
    a1 = _conv_bn_relu_gemm(p1, w1, s1, sh1, jnp.bfloat16, tm)     # (Mp, c_mid)
    a1 = a1[:m].reshape(b, h2, w2, c_mid)

    # conv2 (+ fused 1x1 "out" conv) as a single GEMM.
    k2 = 9 * c_mid
    k2p = _round_up(k2, 128)
    p2 = jnp.pad(_im2col_3x3(a1), ((0, mp - m), (0, k2p - k2)))    # already bf16
    w2_mat = jnp.pad(_conv3x3_weight_matrix(conv2_w.astype(jnp.float32)),
                     ((0, k2p - k2), (0, 0))).astype(jnp.bfloat16)
    s2, sh2 = _fold_bn(bn2_gamma, bn2_beta, bn2_mean, bn2_var, eps)
    wout = out_w.reshape(pred, -1).T.astype(jnp.float32)           # (c_out, pred)
    bout = out_b.reshape(1, pred).astype(jnp.float32)
    z_flat, o_flat = _conv_bn_relu_plus_1x1_gemm(p2, w2_mat, s2, sh2, wout, bout, tm)

    z_out = jnp.transpose(z_flat[:m].reshape(b, h2, w2, -1), (0, 3, 1, 2))
    out = jnp.transpose(o_flat[:m].reshape(b, h2, w2, -1), (0, 3, 1, 2))

    # TODO(synk): the uncertain_map/last_out ROI-refinement branch uses select_roi
    # (not defined in the spec); only the `uncertain_map is None` path is implemented,
    # so semantic_out == uncertain_map == None here.
    semantic_out = None
    return z_out, out, semantic_out


# ----------------------------------------------------------------------------
# Pure-JAX f32 reference (identical semantics) for verification.
# ----------------------------------------------------------------------------
def psdb_block_reference(z, skip,
                         conv1_w, bn1_gamma, bn1_beta, bn1_mean, bn1_var,
                         conv2_w, bn2_gamma, bn2_beta, bn2_mean, bn2_var,
                         out_w, out_b, eps=1e-5):
    _, _, h, w = z.shape
    uh = _bilinear_up2_matrix(h)
    uw = _bilinear_up2_matrix(w)
    zu = jnp.einsum('oh,pw,bchw->bcop', uh, uw, z.astype(jnp.float32))
    x = jnp.concatenate([zu, skip.astype(jnp.float32)], axis=1) if skip is not None else zu

    def conv_bn_relu(inp, wt, g, bta, mu, var):
        y = lax.conv_general_dilated(inp, wt, (1, 1), ((1, 1), (1, 1)),
                                     dimension_numbers=('NCHW', 'OIHW', 'NCHW'))
        s = g / jnp.sqrt(var + eps)
        sh = bta - mu * s
        y = y * s[None, :, None, None] + sh[None, :, None, None]
        return jnp.maximum(y, 0.0)

    a1 = conv_bn_relu(x, conv1_w, bn1_gamma, bn1_beta, bn1_mean, bn1_var)
    z_out = conv_bn_relu(a1, conv2_w, bn2_gamma, bn2_beta, bn2_mean, bn2_var)
    out = lax.conv_general_dilated(z_out, out_w, (1, 1), ((0, 0), (0, 0)),
                                   dimension_numbers=('NCHW', 'OIHW', 'NCHW'))
    out = out + out_b[None, :, None, None]
    return z_out, out


if __name__ == "__main__":
    B, in_ch, skip_ch, H, W = 2, 4, 4, 8, 8
    out_ch = 32            # mid_hidd == out_channels
    pred_ch = 4            # predict_channel
    H2, W2 = 2 * H, 2 * W

    key = jax.random.PRNGKey(0)
    ks = jax.random.split(key, 16)
    z = jax.random.normal(ks[0], (B, in_ch, H, W), jnp.float32)
    skip = jax.random.normal(ks[1], (B, skip_ch, H2, W2), jnp.float32)

    c1_in = in_ch + skip_ch
    conv1_w = 0.1 * jax.random.normal(ks[2], (out_ch, c1_in, 3, 3), jnp.float32)
    bn1_gamma = 1.0 + 0.1 * jax.random.normal(ks[3], (out_ch,), jnp.float32)
    bn1_beta = 0.1 * jax.random.normal(ks[4], (out_ch,), jnp.float32)
    bn1_mean = 0.05 * jax.random.normal(ks[5], (out_ch,), jnp.float32)
    bn1_var = 0.5 + jax.random.uniform(ks[6], (out_ch,), jnp.float32)

    conv2_w = 0.05 * jax.random.normal(ks[7], (out_ch, out_ch, 3, 3), jnp.float32)
    bn2_gamma = 1.0 + 0.1 * jax.random.normal(ks[8], (out_ch,), jnp.float32)
    bn2_beta = 0.1 * jax.random.normal(ks[9], (out_ch,), jnp.float32)
    bn2_mean = 0.05 * jax.random.normal(ks[10], (out_ch,), jnp.float32)
    bn2_var = 0.5 + jax.random.uniform(ks[11], (out_ch,), jnp.float32)

    out_w = 0.1 * jax.random.normal(ks[12], (pred_ch, out_ch, 1, 1), jnp.float32)
    out_b = 0.1 * jax.random.normal(ks[13], (pred_ch,), jnp.float32)

    args = (z, skip,
            conv1_w, bn1_gamma, bn1_beta, bn1_mean, bn1_var,
            conv2_w, bn2_gamma, bn2_beta, bn2_mean, bn2_var,
            out_w, out_b)

    z_out, out, semantic_out = psdb_block_forward(*args)
    z_out, out = jax.block_until_ready((z_out, out))

    z_ref, out_ref = psdb_block_reference(*args)
    z_ref, out_ref = jax.block_until_ready((z_ref, out_ref))

    assert z_out.shape == (B, out_ch, H2, W2), z_out.shape
    assert out.shape == (B, pred_ch, H2, W2), out.shape
    assert semantic_out is None
    # bf16 MXU operands with f32 accumulation -> loose-ish tolerance vs f32 ref.
    np.testing.assert_allclose(np.asarray(z_out), np.asarray(z_ref), rtol=5e-2, atol=5e-2)
    np.testing.assert_allclose(np.asarray(out), np.asarray(out_ref), rtol=5e-2, atol=5e-2)
    print("KERNEL_OK")
</pallas_src>

<mosaic_0001>
module attributes {stable_mosaic.version = 11 : i64} {
  func.func @_gemm_bn_relu_kernel(%arg0: i32, %arg1: memref<256x128xbf16, #tpu.memory_space<vmem>>, %arg2: memref<128x32xbf16, #tpu.memory_space<vmem>>, %arg3: memref<1x32xf32, #tpu.memory_space<vmem>>, %arg4: memref<1x32xf32, #tpu.memory_space<vmem>>, %arg5: memref<256x32xbf16, #tpu.memory_space<vmem>>) attributes {dimension_semantics = [#tpu.dimension_semantics<parallel>], iteration_bounds = array<i64: 2>, scalar_prefetch = 0 : i64, scratch_operands = 0 : i64, tpu.core_type = #tpu.core_type<tc>, window_params = [{transform_indices = @transform_0, window_bounds = array<i64: 256, 128>}, {pipeline_mode = #tpu.pipeline_mode<synchronous>, transform_indices = @transform_1, window_bounds = array<i64: 128, 32>}, {pipeline_mode = #tpu.pipeline_mode<synchronous>, transform_indices = @transform_2, window_bounds = array<i64: 1, 32>}, {pipeline_mode = #tpu.pipeline_mode<synchronous>, transform_indices = @transform_3, window_bounds = array<i64: 1, 32>}, {transform_indices = @transform_4, window_bounds = array<i64: 256, 32>}]} {
    %c0 = arith.constant 0 : index
    %c0_0 = arith.constant 0 : index
    %0 = vector.load %arg1[%c0, %c0_0] : memref<256x128xbf16, #tpu.memory_space<vmem>>, vector<256x128xbf16>
    %c0_1 = arith.constant 0 : index
    %c0_2 = arith.constant 0 : index
    %1 = vector.load %arg2[%c0_1, %c0_2] : memref<128x32xbf16, #tpu.memory_space<vmem>>, vector<128x32xbf16>
    %cst = arith.constant dense<0.000000e+00> : vector<256x32xf32>
    %2 = tpu.matmul %0, %1, %cst {dimension_numbers = #tpu.dot_dimension_numbers<[1], [0], [0], [1], [0, 0, 1, 1], [], []>} : vector<256x128xbf16>, vector<128x32xbf16>, vector<256x32xf32> -> vector<256x32xf32>
    %c0_3 = arith.constant 0 : index
    %c0_4 = arith.constant 0 : index
    %3 = vector.load %arg3[%c0_3, %c0_4] : memref<1x32xf32, #tpu.memory_space<vmem>>, vector<1x32xf32>
    %4 = vector.broadcast %3 : vector<1x32xf32> to vector<256x32xf32>
    %5 = arith.mulf %2, %4 : vector<256x32xf32>
    %c0_5 = arith.constant 0 : index
    %c0_6 = arith.constant 0 : index
    %6 = vector.load %arg4[%c0_5, %c0_6] : memref<1x32xf32, #tpu.memory_space<vmem>>, vector<1x32xf32>
    %7 = vector.broadcast %6 : vector<1x32xf32> to vector<256x32xf32>
    %8 = arith.addf %5, %7 : vector<256x32xf32>
    %cst_7 = arith.constant 0.000000e+00 : f32
    %9 = vector.broadcast %cst_7 : f32 to vector<256x32xf32>
    %10 = arith.maximumf %8, %9 : vector<256x32xf32>
    %11 = arith.truncf %10 : vector<256x32xf32> to vector<256x32xbf16>
    %c0_8 = arith.constant 0 : index
    %c0_9 = arith.constant 0 : index
    %12 = vector.load %arg5[%c0_8, %c0_9] : memref<256x32xbf16, #tpu.memory_space<vmem>>, vector<256x32xbf16>
    tpu.vector_store %arg5[%c0_8, %c0_9], %11 {strides = array<i32>} : memref<256x32xbf16, #tpu.memory_space<vmem>>, vector<256x32xbf16>,
    return
  }
  func.func @transform_0(%arg0: i32) -> (i32, i32) {
    %c0_i32 = arith.constant 0 : i32
    %c0_i32_0 = arith.constant 0 : i32
    return %arg0, %c0_i32 : i32, i32
  }
  func.func @transform_1(%arg0: i32) -> (i32, i32) {
    %c0_i32 = arith.constant 0 : i32
    %c0_i32_0 = arith.constant 0 : i32
    %c0_i32_1 = arith.constant 0 : i32
    return %c0_i32, %c0_i32_0 : i32, i32
  }
  func.func @transform_2(%arg0: i32) -> (i32, i32) {
    %c0_i32 = arith.constant 0 : i32
    %c0_i32_0 = arith.constant 0 : i32
    %c0_i32_1 = arith.constant 0 : i32
    return %c0_i32, %c0_i32_0 : i32, i32
  }
  func.func @transform_3(%arg0: i32) -> (i32, i32) {
    %c0_i32 = arith.constant 0 : i32
    %c0_i32_0 = arith.constant 0 : i32
    %c0_i32_1 = arith.constant 0 : i32
    return %c0_i32, %c0_i32_0 : i32, i32
  }
  func.func @transform_4(%arg0: i32) -> (i32, i32) {
    %c0_i32 = arith.constant 0 : i32
    %c0_i32_0 = arith.constant 0 : i32
    return %arg0, %c0_i32 : i32, i32
  }
}

</mosaic_0001>

<llo_original>
// kernel: tpu_custom_call.1
$region0: #{tpu_custom_call.1}
  #allocation0 [shape = 'u32[]', space=smem, size = 0x4, offset = 0x4, fixed_abs, tag = 'smem constant byte address 0x4 - core index']
  #allocation1 [shape = 'u32[144,128]{1,0:T(1,128)}', space=vmem, size = 0x12000, scoped, tag = 'internal scratch']
  %s0 = inlined_call_operand.hbm [shape: bf16[512,128], index: 0, kind: input, shape index: {}]
  %s1 = inlined_call_operand.vmem [shape: bf16[128,32], index: 1, kind: input, shape index: {}]
  %s2 = inlined_call_operand.vmem [shape: f32[1,32], index: 2, kind: input, shape index: {}]
  %s3 = inlined_call_operand.vmem [shape: f32[1,32], index: 3, kind: input, shape index: {}]
  %s4 = inlined_call_operand.vmem [shape: bf16[512,32], index: 4, kind: output, shape index: {}]
  %s5 = sld [smem:[#allocation0]]
  $region53: #{tpu_custom_call.1} parent=0
    _
  %s7 = ssub.s32 1, %s5
  %s8 = scalar_select 0, %s7, %s5
  $region1: #{tpu_custom_call.1} parent=0
    #allocation2 [shape = 'u8[131072]{0}', space=vmem, size = 0x20000, scoped, tag = 'input window, operand 0']
    #allocation3 [shape = 's32[2]{0}', space=sflag, size = 0x8, scoped, tag = 'scoped memory for tpu_custom_call.1']
    %9 = vsyncpa [#allocation3], 0
    %s10 = scalar_lea.sflag [#allocation3], 1
    %11 = vsyncpa %s10, 0
    loop: start=0, step=1, limit=4
    $region2: #{tpu_custom_call.1} parent=1 // loop_pre_header
      _
    $region3: #{tpu_custom_call.1} parent=1 // loop_header
      %s13 = sphi 0, %s17
      %p14 = scmp.ge.s32.totalorder %s13, 4
      %s23 = sphi 0, %s25
      %s26 = sphi 0, %s23
      %s27 = sphi 0, %s26
      %s43 = sphi 0, %s27
      %s47 = sphi 0, %s47
      %s49 = sphi 0, %s47
      %s50 = sphi 0, %s49
      %s64 = sphi 0, %s50
      %s68 = sphi 0, %s68
      %s70 = sphi 0, %s68
      %s71 = sphi 0, %s70
      %s85 = sphi 0, %s71
      %s89 = sphi 0, %s89
      %s91 = sphi 0, %s89
      %s92 = sphi 0, %s91
      %s106 = sphi 0, %s92
      %s112 = sphi 0, %s114
      %s115 = sphi 0, %s112
      %s116 = sphi 0, %s115
      %s132 = sphi 0, %s116
    $region4: #{tpu_custom_call.1} parent=1 // loop_header_branch
      %16 = sbr.rel (%p14) target = $region8
    $region5: #{tpu_custom_call.1} parent=1 // loop_body
      %s18 = ssub.s32 %s13, 1
      %s19 = ssub.s32 %s13, 2
      %s20 = sadd.s32 %s13, 1
      %s21 = ssub.s32 %s13, %s20
      %p22 = scmp.eq.s32.totalorder %s21, 0
      %s24 = sadd.s32 %s23, 1
      %s25 = scalar_select %p22, %s23, %s24
      %p28 = pneg %p22
      %p29 = scmp.eq.s32.totalorder %s13, 1
      %p30 = por %p28, %p29
      %p31 = scmp.ne.s32.totalorder %s23, %s26
      %p32 = scmp.eq.s32.totalorder %s13, 0
      %p33 = por %p31, %p32
      %p34 = scmp.ne.s32.totalorder %s23, %s26
      %p35 = scmp.eq.s32.totalorder %s18, 1
      %p36 = por %p34, %p35
      %p37 = scmp.ne.s32.totalorder %s26, %s27
      %p38 = scmp.eq.s32.totalorder %s18, 0
      %p39 = por %p37, %p38
      %p40 = scmp.ne.s32.totalorder %s26, %s27
      %p41 = scmp.eq.s32.totalorder %s19, 1
      %p42 = por %p40, %p41
      %p44 = scmp.ne.s32.totalorder %s27, %s43
      %p45 = scmp.eq.s32.totalorder %s19, 0
      %p46 = por %p44, %p45
      %s48 = sadd.s32 %s47, 1
      %p51 = scmp.eq.s32.totalorder %s13, 1
      %p52 = scmp.ne.s32.totalorder %s47, %s49
      %p53 = scmp.eq.s32.totalorder %s13, 0
      %p54 = por %p52, %p53
      %p55 = scmp.ne.s32.totalorder %s47, %s49
      %p56 = scmp.eq.s32.totalorder %s18, 1
      %p57 = por %p55, %p56
      %p58 = scmp.ne.s32.totalorder %s49, %s50
      %p59 = scmp.eq.s32.totalorder %s18, 0
      %p60 = por %p58, %p59
      %p61 = scmp.ne.s32.totalorder %s49, %s50
      %p62 = scmp.eq.s32.totalorder %s19, 1
      %p63 = por %p61, %p62
      %p65 = scmp.ne.s32.totalorder %s50, %s64
      %p66 = scmp.eq.s32.totalorder %s19, 0
      %p67 = por %p65, %p66
      %s69 = sadd.s32 %s68, 1
      %p72 = scmp.eq.s32.totalorder %s13, 1
      %p73 = scmp.ne.s32.totalorder %s68, %s70
      %p74 = scmp.eq.s32.totalorder %s13, 0
      %p75 = por %p73, %p74
      %p76 = scmp.ne.s32.totalorder %s68, %s70
      %p77 = scmp.eq.s32.totalorder %s18, 1
      %p78 = por %p76, %p77
      %p79 = scmp.ne.s32.totalorder %s70, %s71
      %p80 = scmp.eq.s32.totalorder %s18, 0
      %p81 = por %p79, %p80
      %p82 = scmp.ne.s32.totalorder %s70, %s71
      %p83 = scmp.eq.s32.totalorder %s19, 1
      %p84 = por %p82, %p83
      %p86 = scmp.ne.s32.totalorder %s71, %s85
      %p87 = scmp.eq.s32.totalorder %s19, 0
      %p88 = por %p86, %p87
      %s90 = sadd.s32 %s89, 1
      %p93 = scmp.eq.s32.totalorder %s13, 1
      %p94 = scmp.ne.s32.totalorder %s89, %s91
      %p95 = scmp.eq.s32.totalorder %s13, 0
      %p96 = por %p94, %p95
      %p97 = scmp.ne.s32.totalorder %s89, %s91
      %p98 = scmp.eq.s32.totalorder %s18, 1
      %p99 = por %p97, %p98
      %p100 = scmp.ne.s32.totalorder %s91, %s92
      %p101 = scmp.eq.s32.totalorder %s18, 0
      %p102 = por %p100, %p101
      %p103 = scmp.ne.s32.totalorder %s91, %s92
      %p104 = scmp.eq.s32.totalorder %s19, 1
      %p105 = por %p103, %p104
      %p107 = scmp.ne.s32.totalorder %s92, %s106
      %p108 = scmp.eq.s32.totalorder %s19, 0
      %p109 = por %p107, %p108
      %s110 = ssub.s32 %s13, %s20
      %p111 = scmp.eq.s32.totalorder %s110, 0
      %s113 = sadd.s32 %s112, 1
      %s114 = scalar_select %p111, %s112, %s113
      %p117 = pneg %p111
      %p118 = scmp.eq.s32.totalorder %s13, 1
      %p119 = por %p117, %p118
      %p120 = scmp.ne.s32.totalorder %s112, %s115
      %p121 = scmp.eq.s32.totalorder %s13, 0
      %p122 = por %p120, %p121
      %p123 = scmp.ne.s32.totalorder %s112, %s115
      %p124 = scmp.eq.s32.totalorder %s18, 1
      %p125 = por %p123, %p124
      %p126 = scmp.ne.s32.totalorder %s115, %s116
      %p127 = scmp.eq.s32.totalorder %s18, 0
      %p128 = por %p126, %p127
      %p129 = scmp.ne.s32.totalorder %s115, %s116
      %p130 = scmp.eq.s32.totalorder %s19, 1
      %p131 = por %p129, %p130
      %p133 = scmp.ne.s32.totalorder %s116, %s132
      %p134 = scmp.eq.s32.totalorder %s19, 0
      %p135 = por %p133, %p134
      %p136 = scmp.le.s32.totalorder 1, %s13
      %p137 = scmp.lt.s32.totalorder %s13, 3
      %p138 = pnand %p136, %p137
      %p139 = pneg %p138
      // Predicated region
      $region9: #{tpu_custom_call.1} parent=5 // pred_check
        _
      $region10: #{tpu_custom_call.1} parent=5 // pred_check_branch
        %141 = sbr.rel (%p138) target = $region12
      $region11: #{tpu_custom_call.1} parent=5 // pred_region
        %s142 = ssub.s32 %s13, 1
        // Predicated region
        $region13: #{tpu_custom_call.1} parent=11 // pred_check
          %p143 = pneg %p60
        $region14: #{tpu_custom_call.1} parent=11 // pred_check_branch
          %145 = sbr.rel (%p143) target = $region16
        $region15: #{tpu_custom_call.1} parent=11 // pred_region
          _
        $region16: #{tpu_custom_call.1} parent=11 // pred_fallthru
          _
        // Predicated region
        $region17: #{tpu_custom_call.1} parent=11 // pred_check
          %p146 = pneg %p81
        $region18: #{tpu_custom_call.1} parent=11 // pred_check_branch
          %148 = sbr.rel (%p146) target = $region20
        $region19: #{tpu_custom_call.1} parent=11 // pred_region
          _
        $region20: #{tpu_custom_call.1} parent=11 // pred_fallthru
          _
        // Predicated region
        $region21: #{tpu_custom_call.1} parent=11 // pred_check
          %p149 = pneg %p102
        $region22: #{tpu_custom_call.1} parent=11 // pred_check_branch
          %151 = sbr.rel (%p149) target = $region24
        $region23: #{tpu_custom_call.1} parent=11 // pred_region
          _
        $region24: #{tpu_custom_call.1} parent=11 // pred_fallthru
          _
      $region12: #{tpu_custom_call.1} parent=5 // pred_fallthru
        _
      %p152 = scmp.lt.s32.totalorder %s13, 2
      // Predicated region
      $region25: #{tpu_custom_call.1} parent=5 // pred_check
        %p153 = pneg %p152
      $region26: #{tpu_custom_call.1} parent=5 // pred_check_branch
        %155 = sbr.rel (%p153) target = $region28
      $region27: #{tpu_custom_call.1} parent=5 // pred_region
        // Predicated region
        $region29: #{tpu_custom_call.1} parent=27 // pred_check
          %p156 = pneg %p33
        $region30: #{tpu_custom_call.1} parent=27 // pred_check_branch
          %158 = sbr.rel (%p156) target = $region32
        $region31: #{tpu_custom_call.1} parent=27 // pred_region
          %s159 = sand.u32 %s23, 1
          %s160 = scalar_lea.sflag [#allocation3], %s159
          %s161 = sand.u32 %s23, 1
          %s162 = smul.addr %s161, 128
          %s163 = scalar_lea.vmem [#allocation2], %s162
          %s164 = smul.u32 32, %s13
          %s166 = ssub.s32 2048, 2048
          %167 = vsyncadd %s160, %s166
          %s168 = smul.addr %s164, 64
          %s169 = scalar_lea.hbm %s0, %s168
          %s170 = sshll.u32 %s163, 4
          %s171 = int_to_ptr.vmem [resolvable:$true] %s170
          %176 = dma.hbm_to_vmem [thread:$0]  %s169, 2048, %s171, %s160, 64, 64, 4
        $region32: #{tpu_custom_call.1} parent=27 // pred_fallthru
          _
      $region28: #{tpu_custom_call.1} parent=5 // pred_fallthru
        _
      %p177 = scmp.le.s32.totalorder 1, %s13
      %p178 = scmp.lt.s32.totalorder %s13, 3
      %p179 = pnand %p177, %p178
      %p180 = pneg %p179
      // Predicated region
      $region33: #{tpu_custom_call.1} parent=5 // pred_check
        _
      $region34: #{tpu_custom_call.1} parent=5 // pred_check_branch
        %182 = sbr.rel (%p179) target = $region36
      $region35: #{tpu_custom_call.1} parent=5 // pred_region
        %s183 = ssub.s32 %s13, 1
        %s184 = sand.u32 %s26, 1
        %s185 = scalar_lea.sflag [#allocation3], %s184
        %s186 = sand.u32 %s26, 1
        %s187 = smul.addr %s186, 128
        %s188 = scalar_lea.vmem [#allocation2], %s187
        // Predicated region
        $region37: #{tpu_custom_call.1} parent=35 // pred_check
          %p189 = pneg %p39
        $region38: #{tpu_custom_call.1} parent=35 // pred_check_branch
          %191 = sbr.rel (%p189) target = $region40
        $region39: #{tpu_custom_call.1} parent=35 // pred_region
          %192 = dma.done %s185, 2048
        $region40: #{tpu_custom_call.1} parent=35 // pred_fallthru
          _
        %s193 = sand.u32 %s26, 1
        %s194 = scalar_lea.sflag [#allocation3], %s193
        %s195 = sand.u32 %s26, 1
        %s196 = smul.addr %s195, 128
        %s197 = scalar_lea.vmem [#allocation2], %s196
        %p198 = pneg %p39
        %p199 = pneg %p36
        %p200 = pneg %p60
        %p201 = pneg %p57
        %p202 = pneg %p81
        %p203 = pneg %p78
        %p204 = pneg %p102
        %p205 = pneg %p99
        %p206 = pneg %p128
        %p207 = pneg %p125
        %s208 = smul.u32 32, %s18
        %p209 = scmp.lt.s32.totalorder %s208, 63
        %s210 = scalar_select %p209, %s208, 63
        %s211 = smul.addr %s210, 4
        %s212 = scalar_lea.vmem %s4, %s211
        %s213 = smul.u32 32, %s18
        %s214 = smul.u32 32, %s18
        %p215 = scmp.lt.s32.totalorder %s214, 63
        %s216 = scalar_select %p215, %s214, 63
        %s217 = smul.addr %s216, 4
        %s218 = scalar_lea.vmem %s4, %s217
        %s219 = smul.u32 32, %s18
        %v221 = vld [vmem:[%s188] sm:$0xf]
        %v222 = vld [vmem:[%s188 + $0x4] sm:$0xf]
        %v223 = vld [vmem:[%s188 + $0x8] sm:$0xf]
        %v224 = vld [vmem:[%s188 + $0xc] sm:$0xf]
        %v225 = vld [vmem:[%s188 + $0x10] sm:$0xf]
        %v226 = vld [vmem:[%s188 + $0x14] sm:$0xf]
        %v227 = vld [vmem:[%s188 + $0x18] sm:$0xf]
        %v228 = vld [vmem:[%s188 + $0x1c] sm:$0xf]
        %v229 = vld [vmem:[%s188 + $0x20] sm:$0xf]
        %v230 = vld [vmem:[%s188 + $0x24] sm:$0xf]
        %v231 = vld [vmem:[%s188 + $0x28] sm:$0xf]
        %v232 = vld [vmem:[%s188 + $0x2c] sm:$0xf]
        %v233 = vld [vmem:[%s188 + $0x30] sm:$0xf]
        %v234 = vld [vmem:[%s188 + $0x34] sm:$0xf]
        %v235 = vld [vmem:[%s188 + $0x38] sm:$0xf]
        %v236 = vld [vmem:[%s188 + $0x3c] sm:$0xf]
        %v237 = vld [vmem:[%s188 + $0x40] sm:$0xf]
        %v238 = vld [vmem:[%s188 + $0x44] sm:$0xf]
        %v239 = vld [vmem:[%s188 + $0x48] sm:$0xf]
        %v240 = vld [vmem:[%s188 + $0x4c] sm:$0xf]
        %v241 = vld [vmem:[%s188 + $0x50] sm:$0xf]
        %v242 = vld [vmem:[%s188 + $0x54] sm:$0xf]
        %v243 = vld [vmem:[%s188 + $0x58] sm:$0xf]
        %v244 = vld [vmem:[%s188 + $0x5c] sm:$0xf]
        %v245 = vld [vmem:[%s188 + $0x60] sm:$0xf]
        %v246 = vld [vmem:[%s188 + $0x64] sm:$0xf]
        %v247 = vld [vmem:[%s188 + $0x68] sm:$0xf]
        %v248 = vld [vmem:[%s188 + $0x6c] sm:$0xf]
        %v249 = vld [vmem:[%s188 + $0x70] sm:$0xf]
        %v250 = vld [vmem:[%s188 + $0x74] sm:$0xf]
        %v251 = vld [vmem:[%s188 + $0x78] sm:$0xf]
        %v252 = vld [vmem:[%s188 + $0x7c] sm:$0xf]
        %v253 = vld [vmem:[%s1] sm:$0xf]
        %v254 = vld [vmem:[%s1 + $0x4] sm:$0xf]
        %v255 = vld [vmem:[%s1 + $0x8] sm:$0xf]
        %v256 = vld [vmem:[%s1 + $0xc] sm:$0xf]
        %v257 = vld [vmem:[%s1 + $0x10] sm:$0xf]
        %v258 = vld [vmem:[%s1 + $0x14] sm:$0xf]
        %v259 = vld [vmem:[%s1 + $0x18] sm:$0xf]
        %v260 = vld [vmem:[%s1 + $0x1c] sm:$0xf]
        %v261 = vld [vmem:[%s1 + $0x20] sm:$0xf]
        %v262 = vld [vmem:[%s1 + $0x24] sm:$0xf]
        %v263 = vld [vmem:[%s1 + $0x28] sm:$0xf]
        %v264 = vld [vmem:[%s1 + $0x2c] sm:$0xf]
        %v265 = vld [vmem:[%s1 + $0x30] sm:$0xf]
        %v266 = vld [vmem:[%s1 + $0x34] sm:$0xf]
        %v267 = vld [vmem:[%s1 + $0x38] sm:$0xf]
        %v268 = vld [vmem:[%s1 + $0x3c] sm:$0xf]
        %v301 = vunpack.c.l.b16 %v221
        %v302 = vunpack.c.l.b16 %v222
        %v303 = vunpack.c.l.b16 %v223
        %v304 = vunpack.c.l.b16 %v224
        %v305 = vunpack.c.l.b16 %v225
        %v306 = vunpack.c.l.b16 %v226
        %v307 = vunpack.c.l.b16 %v227
        %v308 = vunpack.c.l.b16 %v228
        %v309 = vunpack.c.l.b16 %v229
        %v310 = vunpack.c.l.b16 %v230
        %v311 = vunpack.c.l.b16 %v231
        %v312 = vunpack.c.l.b16 %v232
        %v313 = vunpack.c.l.b16 %v233
        %v314 = vunpack.c.l.b16 %v234
        %v315 = vunpack.c.l.b16 %v235
        %v316 = vunpack.c.l.b16 %v236
        %v317 = vunpack.c.l.b16 %v237
        %v318 = vunpack.c.l.b16 %v238
        %v319 = vunpack.c.l.b16 %v239
        %v320 = vunpack.c.l.b16 %v240
        %v321 = vunpack.c.l.b16 %v241
        %v322 = vunpack.c.l.b16 %v242
        %v323 = vunpack.c.l.b16 %v243
        %v324 = vunpack.c.l.b16 %v244
        %v325 = vunpack.c.l.b16 %v245
        %v326 = vunpack.c.l.b16 %v246
        %v327 = vunpack.c.l.b16 %v247
        %v328 = vunpack.c.l.b16 %v248
        %v329 = vunpack.c.l.b16 %v249
        %v330 = vunpack.c.l.b16 %v250
        %v331 = vunpack.c.l.b16 %v251
        %v332 = vunpack.c.l.b16 %v252
        %v333 = vpack.c.b16 %v302, %v301
        %v334 = vpack.c.b16 %v304, %v303
        %v335 = vpack.c.b16 %v306, %v305
        %v336 = vpack.c.b16 %v308, %v307
        %v337 = vpack.c.b16 %v310, %v309
        %v338 = vpack.c.b16 %v312, %v311
        %v339 = vpack.c.b16 %v314, %v313
        %v340 = vpack.c.b16 %v316, %v315
        %v341 = vpack.c.b16 %v318, %v317
        %v342 = vpack.c.b16 %v320, %v319
        %v343 = vpack.c.b16 %v322, %v321
        %v344 = vpack.c.b16 %v324, %v323
        %v345 = vpack.c.b16 %v326, %v325
        %v346 = vpack.c.b16 %v328, %v327
        %v347 = vpack.c.b16 %v330, %v329
        %v348 = vpack.c.b16 %v332, %v331
        %v381 = vunpack.c.l.b16 %v253
        %v382 = vunpack.c.l.b16 %v254
        %v383 = vunpack.c.l.b16 %v255
        %v384 = vunpack.c.l.b16 %v256
        %v385 = vunpack.c.l.b16 %v257
        %v386 = vunpack.c.l.b16 %v258
        %v387 = vunpack.c.l.b16 %v259
        %v388 = vunpack.c.l.b16 %v260
        %v389 = vunpack.c.l.b16 %v261
        %v390 = vunpack.c.l.b16 %v262
        %v391 = vunpack.c.l.b16 %v263
        %v392 = vunpack.c.l.b16 %v264
        %v393 = vunpack.c.l.b16 %v265
        %v394 = vunpack.c.l.b16 %v266
        %v395 = vunpack.c.l.b16 %v267
        %v396 = vunpack.c.l.b16 %v268
        %v397 = vpack.c.b16 %v382, %v381
        %v398 = vpack.c.b16 %v384, %v383
        %v399 = vpack.c.b16 %v386, %v385
        %v400 = vpack.c.b16 %v388, %v387
        %v401 = vpack.c.b16 %v390, %v389
        %v402 = vpack.c.b16 %v392, %v391
        %v403 = vpack.c.b16 %v394, %v393
        %v404 = vpack.c.b16 %v396, %v395
        %413 = vmatprep.subr.bf16.mxu0 0
        %414 = vmatpush1.bf16.msra.mxu0 %v404
        %415 = vmatprep.subr.bf16.mxu0 0
        %416 = vmatpush1.bf16.msra.mxu0 %v403
        %417 = vmatprep.subr.bf16.mxu0 0
        %418 = vmatpush1.bf16.msra.mxu0 %v402
        %419 = vmatprep.subr.bf16.mxu0 0
        %420 = vmatpush1.bf16.msra.mxu0 %v401
        %421 = vmatprep.subr.bf16.mxu0 0
        %422 = vmatpush1.bf16.msra.mxu0 %v400
        %423 = vmatprep.subr.bf16.mxu0 0
        %424 = vmatpush1.bf16.msra.mxu0 %v399
        %425 = vmatprep.subr.bf16.mxu0 0
        %426 = vmatpush1.bf16.msra.mxu0 %v398
        %427 = vmatprep.subr.bf16.mxu0 0
        %428 = vmatpush1.bf16.msra.mxu0 %v397
        %429 = vmatprep.subr.bf16.mxu0 0
        %430 = vmatpush2.bf16.msra.mxu0 0
        %431 = vmatprep.subr.bf16.mxu0 0
        %432 = vmatpush2.bf16.msra.mxu0 0
        %433 = vmatprep.subr.bf16.mxu0 0
        %434 = vmatpush2.bf16.msra.mxu0 0
        %435 = vmatprep.subr.bf16.mxu0 0
        %436 = vmatpush2.bf16.msra.mxu0 0
        %437 = vmatprep.subr.bf16.mxu0 0
        %438 = vmatpush2.bf16.msra.mxu0 0
        %439 = vmatprep.subr.bf16.mxu0 0
        %440 = vmatpush2.bf16.msra.mxu0 0
        %441 = vmatprep.subr.bf16.mxu0 0
        %442 = vmatpush2.bf16.msra.mxu0 0
        %443 = vmatprep.subr.bf16.mxu0 0
        %444 = vmatpush2.bf16.msra.mxu0 0
        %445 = vmatprep.mubr.bf16.mxu0 0
        %446 = vmatmul.mubr.bf16.gmra.mxu0 %v333
        %v447 = vpop.f32.mrf.mxu0
        %v448 = vadd.f32 0.0, %v447
        %v449 = vpop.f32.mrf.mxu0
        %v450 = vpop.f32.mrf.mxu0
        %v451 = vadd.f32 0.0, %v450
        %v452 = vpop.f32.mrf.mxu0
        %453 = vmatprep.mubr.bf16.mxu0 0
        %454 = vmatmul.mubr.bf16.gmra.mxu0 %v334
        %v455 = vpop.f32.mrf.mxu0
        %v456 = vadd.f32 0.0, %v455
        %v457 = vpop.f32.mrf.mxu0
        %v458 = vpop.f32.mrf.mxu0
        %v459 = vadd.f32 0.0, %v458
        %v460 = vpop.f32.mrf.mxu0
        %461 = vmatprep.mubr.bf16.mxu0 0
        %462 = vmatmul.mubr.bf16.gmra.mxu0 %v335
        %v463 = vpop.f32.mrf.mxu0
        %v464 = vadd.f32 0.0, %v463
        %v465 = vpop.f32.mrf.mxu0
        %v466 = vpop.f32.mrf.mxu0
        %v467 = vadd.f32 0.0, %v466
        %v468 = vpop.f32.mrf.mxu0
        %469 = vmatprep.mubr.bf16.mxu0 0
        %470 = vmatmul.mubr.bf16.gmra.mxu0 %v336
        %v471 = vpop.f32.mrf.mxu0
        %v472 = vadd.f32 0.0, %v471
        %v473 = vpop.f32.mrf.mxu0
        %v474 = vpop.f32.mrf.mxu0
        %v475 = vadd.f32 0.0, %v474
        %v476 = vpop.f32.mrf.mxu0
        %477 = vmatprep.mubr.bf16.mxu0 0
        %478 = vmatmul.mubr.bf16.gmra.mxu0 %v337
        %v479 = vpop.f32.mrf.mxu0
        %v480 = vadd.f32 0.0, %v479
        %v481 = vpop.f32.mrf.mxu0
        %v482 = vpop.f32.mrf.mxu0
        %v483 = vadd.f32 0.0, %v482
        %v484 = vpop.f32.mrf.mxu0
        %485 = vmatprep.mubr.bf16.mxu0 0
        %486 = vmatmul.mubr.bf16.gmra.mxu0 %v338
        %v487 = vpop.f32.mrf.mxu0
        %v488 = vadd.f32 0.0, %v487
        %v489 = vpop.f32.mrf.mxu0
        %v490 = vpop.f32.mrf.mxu0
        %v491 = vadd.f32 0.0, %v490
        %v492 = vpop.f32.mrf.mxu0
        %493 = vmatprep.mubr.bf16.mxu0 0
        %494 = vmatmul.mubr.bf16.gmra.mxu0 %v339
        %v495 = vpop.f32.mrf.mxu0
        %v496 = vadd.f32 0.0, %v495
        %v497 = vpop.f32.mrf.mxu0
        %v498 = vpop.f32.mrf.mxu0
        %v499 = vadd.f32 0.0, %v498
        %v500 = vpop.f32.mrf.mxu0
        %501 = vmatprep.mubr.bf16.mxu0 0
        %502 = vmatmul.mubr.bf16.gmra.mxu0 %v340
        %v503 = vpop.f32.mrf.mxu0
        %v504 = vadd.f32 0.0, %v503
        %v505 = vpop.f32.mrf.mxu0
        %v506 = vpop.f32.mrf.mxu0
        %v507 = vadd.f32 0.0, %v506
        %v508 = vpop.f32.mrf.mxu0
        %509 = vmatprep.mubr.bf16.mxu0 0
        %510 = vmatmul.mubr.bf16.gmra.mxu0 %v341
        %v511 = vpop.f32.mrf.mxu0
        %v512 = vadd.f32 0.0, %v511
        %v513 = vpop.f32.mrf.mxu0
        %v514 = vpop.f32.mrf.mxu0
        %v515 = vadd.f32 0.0, %v514
        %v516 = vpop.f32.mrf.mxu0
        %517 = vmatprep.mubr.bf16.mxu0 0
        %518 = vmatmul.mubr.bf16.gmra.mxu0 %v342
        %v519 = vpop.f32.mrf.mxu0
        %v520 = vadd.f32 0.0, %v519
        %v521 = vpop.f32.mrf.mxu0
        %v522 = vpop.f32.mrf.mxu0
        %v523 = vadd.f32 0.0, %v522
        %v524 = vpop.f32.mrf.mxu0
        %525 = vmatprep.mubr.bf16.mxu0 0
        %526 = vmatmul.mubr.bf16.gmra.mxu0 %v343
        %v527 = vpop.f32.mrf.mxu0
        %v528 = vadd.f32 0.0, %v527
        %v529 = vpop.f32.mrf.mxu0
        %v530 = vpop.f32.mrf.mxu0
        %v531 = vadd.f32 0.0, %v530
        %v532 = vpop.f32.mrf.mxu0
        %533 = vmatprep.mubr.bf16.mxu0 0
        %534 = vmatmul.mubr.bf16.gmra.mxu0 %v344
        %v535 = vpop.f32.mrf.mxu0
        %v536 = vadd.f32 0.0, %v535
        %v537 = vpop.f32.mrf.mxu0
        %v538 = vpop.f32.mrf.mxu0
        %v539 = vadd.f32 0.0, %v538
        %v540 = vpop.f32.mrf.mxu0
        %541 = vmatprep.mubr.bf16.mxu0 0
        %542 = vmatmul.mubr.bf16.gmra.mxu0 %v345
        %v543 = vpop.f32.mrf.mxu0
        %v544 = vadd.f32 0.0, %v543
        %v545 = vpop.f32.mrf.mxu0
        %v546 = vpop.f32.mrf.mxu0
        %v547 = vadd.f32 0.0, %v546
        %v548 = vpop.f32.mrf.mxu0
        %549 = vmatprep.mubr.bf16.mxu0 0
        %550 = vmatmul.mubr.bf16.gmra.mxu0 %v346
        %v551 = vpop.f32.mrf.mxu0
        %v552 = vadd.f32 0.0, %v551
        %v553 = vpop.f32.mrf.mxu0
        %v554 = vpop.f32.mrf.mxu0
        %v555 = vadd.f32 0.0, %v554
        %v556 = vpop.f32.mrf.mxu0
        %557 = vmatprep.mubr.bf16.mxu0 0
        %558 = vmatmul.mubr.bf16.gmra.mxu0 %v347
        %v559 = vpop.f32.mrf.mxu0
        %v560 = vadd.f32 0.0, %v559
        %v561 = vpop.f32.mrf.mxu0
        %v562 = vpop.f32.mrf.mxu0
        %v563 = vadd.f32 0.0, %v562
        %v564 = vpop.f32.mrf.mxu0
        %565 = vmatprep.mubr.bf16.mxu0 0
        %566 = vmatmul.mubr.bf16.gmra.mxu0 %v348
        %v567 = vpop.f32.mrf.mxu0
        %v568 = vadd.f32 0.0, %v567
        %v569 = vpop.f32.mrf.mxu0
        %v570 = vpop.f32.mrf.mxu0
        %v571 = vadd.f32 0.0, %v570
        %v572 = vpop.f32.mrf.mxu0
        %573 = vdwg.mxu0
        %v574 = vld [vmem:[%s2] sm:$0x1]
        %v576 = vlaneseq
        %v577 = vshrl.u32 %v576, 7
        %v578 = vsub.s32 0, %v577
        %v579 = vrot.slane %v574, %v578
        %v581 = vmul.f32 %v448, %v579
        %v582 = vmul.f32 %v451, %v579
        %v583 = vmul.f32 %v456, %v579
        %v584 = vmul.f32 %v459, %v579
        %v585 = vmul.f32 %v464, %v579
        %v586 = vmul.f32 %v467, %v579
        %v587 = vmul.f32 %v472, %v579
        %v588 = vmul.f32 %v475, %v579
        %v589 = vmul.f32 %v480, %v579
        %v590 = vmul.f32 %v483, %v579
        %v591 = vmul.f32 %v488, %v579
        %v592 = vmul.f32 %v491, %v579
        %v593 = vmul.f32 %v496, %v579
        %v594 = vmul.f32 %v499, %v579
        %v595 = vmul.f32 %v504, %v579
        %v596 = vmul.f32 %v507, %v579
        %v597 = vmul.f32 %v512, %v579
        %v598 = vmul.f32 %v515, %v579
        %v599 = vmul.f32 %v520, %v579
        %v600 = vmul.f32 %v523, %v579
        %v601 = vmul.f32 %v528, %v579
        %v602 = vmul.f32 %v531, %v579
        %v603 = vmul.f32 %v536, %v579
        %v604 = vmul.f32 %v539, %v579
        %v605 = vmul.f32 %v544, %v579
        %v606 = vmul.f32 %v547, %v579
        %v607 = vmul.f32 %v552, %v579
        %v608 = vmul.f32 %v555, %v579
        %v609 = vmul.f32 %v560, %v579
        %v610 = vmul.f32 %v563, %v579
        %v611 = vmul.f32 %v568, %v579
        %v612 = vmul.f32 %v571, %v579
        %v613 = vld [vmem:[%s3] sm:$0x1]
        %v615 = vlaneseq
        %v616 = vshrl.u32 %v615, 7
        %v617 = vsub.s32 0, %v616
        %v618 = vrot.slane %v613, %v617
        %v620 = vadd.f32 %v581, %v618
        %v621 = vadd.f32 %v582, %v618
        %v622 = vadd.f32 %v583, %v618
        %v623 = vadd.f32 %v584, %v618
        %v624 = vadd.f32 %v585, %v618
        %v625 = vadd.f32 %v586, %v618
        %v626 = vadd.f32 %v587, %v618
        %v627 = vadd.f32 %v588, %v618
        %v628 = vadd.f32 %v589, %v618
        %v629 = vadd.f32 %v590, %v618
        %v630 = vadd.f32 %v591, %v618
        %v631 = vadd.f32 %v592, %v618
        %v632 = vadd.f32 %v593, %v618
        %v633 = vadd.f32 %v594, %v618
        %v634 = vadd.f32 %v595, %v618
        %v635 = vadd.f32 %v596, %v618
        %v636 = vadd.f32 %v597, %v618
        %v637 = vadd.f32 %v598, %v618
        %v638 = vadd.f32 %v599, %v618
        %v639 = vadd.f32 %v600, %v618
        %v640 = vadd.f32 %v601, %v618
        %v641 = vadd.f32 %v602, %v618
        %v642 = vadd.f32 %v603, %v618
        %v643 = vadd.f32 %v604, %v618
        %v644 = vadd.f32 %v605, %v618
        %v645 = vadd.f32 %v606, %v618
        %v646 = vadd.f32 %v607, %v618
        %v647 = vadd.f32 %v608, %v618
        %v648 = vadd.f32 %v609, %v618
        %v649 = vadd.f32 %v610, %v618
        %v650 = vadd.f32 %v611, %v618
        %v651 = vadd.f32 %v612, %v618
        %v652 = vmax.f32 %v620, 0.0
        %v653 = vmax.f32 %v621, 0.0
        %v654 = vmax.f32 %v622, 0.0
        %v655 = vmax.f32 %v623, 0.0
        %v656 = vmax.f32 %v624, 0.0
        %v657 = vmax.f32 %v625, 0.0
        %v658 = vmax.f32 %v626, 0.0
        %v659 = vmax.f32 %v627, 0.0
        %v660 = vmax.f32 %v628, 0.0
        %v661 = vmax.f32 %v629, 0.0
        %v662 = vmax.f32 %v630, 0.0
        %v663 = vmax.f32 %v631, 0.0
        %v664 = vmax.f32 %v632, 0.0
        %v665 = vmax.f32 %v633, 0.0
        %v666 = vmax.f32 %v634, 0.0
        %v667 = vmax.f32 %v635, 0.0
        %v668 = vmax.f32 %v636, 0.0
        %v669 = vmax.f32 %v637, 0.0
        %v670 = vmax.f32 %v638, 0.0
        %v671 = vmax.f32 %v639, 0.0
        %v672 = vmax.f32 %v640, 0.0
        %v673 = vmax.f32 %v641, 0.0
        %v674 = vmax.f32 %v642, 0.0
        %v675 = vmax.f32 %v643, 0.0
        %v676 = vmax.f32 %v644, 0.0
        %v677 = vmax.f32 %v645, 0.0
        %v678 = vmax.f32 %v646, 0.0
        %v679 = vmax.f32 %v647, 0.0
        %v680 = vmax.f32 %v648, 0.0
        %v681 = vmax.f32 %v649, 0.0
        %v682 = vmax.f32 %v650, 0.0
        %v683 = vmax.f32 %v651, 0.0
        %v684 = vpack.c.bf16 %v653, %v652
        %v685 = vpack.c.bf16 %v655, %v654
        %v686 = vpack.c.bf16 %v657, %v656
        %v687 = vpack.c.bf16 %v659, %v658
        %v688 = vpack.c.bf16 %v661, %v660
        %v689 = vpack.c.bf16 %v663, %v662
        %v690 = vpack.c.bf16 %v665, %v664
        %v691 = vpack.c.bf16 %v667, %v666
        %v692 = vpack.c.bf16 %v669, %v668
        %v693 = vpack.c.bf16 %v671, %v670
        %v694 = vpack.c.bf16 %v673, %v672
        %v695 = vpack.c.bf16 %v675, %v674
        %v696 = vpack.c.bf16 %v677, %v676
        %v697 = vpack.c.bf16 %v679, %v678
        %v698 = vpack.c.bf16 %v681, %v680
        %v699 = vpack.c.bf16 %v683, %v682
        %v716 = vunpack.c.l.b16 %v684
        %v717 = vunpack.c.h.b16 %v684
        %v718 = vunpack.c.l.b16 %v685
        %v719 = vunpack.c.h.b16 %v685
        %v720 = vunpack.c.l.b16 %v686
        %v721 = vunpack.c.h.b16 %v686
        %v722 = vunpack.c.l.b16 %v687
        %v723 = vunpack.c.h.b16 %v687
        %v724 = vunpack.c.l.b16 %v688
        %v725 = vunpack.c.h.b16 %v688
        %v726 = vunpack.c.l.b16 %v689
        %v727 = vunpack.c.h.b16 %v689
        %v728 = vunpack.c.l.b16 %v690
        %v729 = vunpack.c.h.b16 %v690
        %v730 = vunpack.c.l.b16 %v691
        %v731 = vunpack.c.h.b16 %v691
        %v732 = vunpack.c.l.b16 %v692
        %v733 = vunpack.c.h.b16 %v692
        %v734 = vunpack.c.l.b16 %v693
        %v735 = vunpack.c.h.b16 %v693
        %v736 = vunpack.c.l.b16 %v694
        %v737 = vunpack.c.h.b16 %v694
        %v738 = vunpack.c.l.b16 %v695
        %v739 = vunpack.c.h.b16 %v695
        %v740 = vunpack.c.l.b16 %v696
        %v741 = vunpack.c.h.b16 %v696
        %v742 = vunpack.c.l.b16 %v697
        %v743 = vunpack.c.h.b16 %v697
        %v744 = vunpack.c.l.b16 %v698
        %v745 = vunpack.c.h.b16 %v698
        %v746 = vunpack.c.l.b16 %v699
        %v747 = vunpack.c.h.b16 %v699
        %v748 = vpack.c.b16 %v716, %v716
        %v749 = vpack.c.b16 %v717, %v717
        %v750 = vpack.c.b16 %v718, %v718
        %v751 = vpack.c.b16 %v719, %v719
        %v752 = vpack.c.b16 %v720, %v720
        %v753 = vpack.c.b16 %v721, %v721
        %v754 = vpack.c.b16 %v722, %v722
        %v755 = vpack.c.b16 %v723, %v723
        %v756 = vpack.c.b16 %v724, %v724
        %v757 = vpack.c.b16 %v725, %v725
        %v758 = vpack.c.b16 %v726, %v726
        %v759 = vpack.c.b16 %v727, %v727
        %v760 = vpack.c.b16 %v728, %v728
        %v761 = vpack.c.b16 %v729, %v729
        %v762 = vpack.c.b16 %v730, %v730
        %v763 = vpack.c.b16 %v731, %v731
        %v764 = vpack.c.b16 %v732, %v732
        %v765 = vpack.c.b16 %v733, %v733
        %v766 = vpack.c.b16 %v734, %v734
        %v767 = vpack.c.b16 %v735, %v735
        %v768 = vpack.c.b16 %v736, %v736
        %v769 = vpack.c.b16 %v737, %v737
        %v770 = vpack.c.b16 %v738, %v738
        %v771 = vpack.c.b16 %v739, %v739
        %v772 = vpack.c.b16 %v740, %v740
        %v773 = vpack.c.b16 %v741, %v741
        %v774 = vpack.c.b16 %v742, %v742
        %v775 = vpack.c.b16 %v743, %v743
        %v776 = vpack.c.b16 %v744, %v744
        %v777 = vpack.c.b16 %v745, %v745
        %v778 = vpack.c.b16 %v746, %v746
        %v779 = vpack.c.b16 %v747, %v747
        %vm812 = vcmask 257024
        %813 = vst.msk [vmem:[%s218] sm:$0xf] %vm812, %v748
        %814 = vst.msk [vmem:[%s218 + $0x4] sm:$0xf] %vm812, %v749
        %815 = vst.msk [vmem:[%s218 + $0x8] sm:$0xf] %vm812, %v750
        %816 = vst.msk [vmem:[%s218 + $0xc] sm:$0xf] %vm812, %v751
        %817 = vst.msk [vmem:[%s218 + $0x10] sm:$0xf] %vm812, %v752
        %818 = vst.msk [vmem:[%s218 + $0x14] sm:$0xf] %vm812, %v753
        %819 = vst.msk [vmem:[%s218 + $0x18] sm:$0xf] %vm812, %v754
        %820 = vst.msk [vmem:[%s218 + $0x1c] sm:$0xf] %vm812, %v755
        %821 = vst.msk [vmem:[%s218 + $0x20] sm:$0xf] %vm812, %v756
        %822 = vst.msk [vmem:[%s218 + $0x24] sm:$0xf] %vm812, %v757
        %823 = vst.msk [vmem:[%s218 + $0x28] sm:$0xf] %vm812, %v758
        %824 = vst.msk [vmem:[%s218 + $0x2c] sm:$0xf] %vm812, %v759
        %825 = vst.msk [vmem:[%s218 + $0x30] sm:$0xf] %vm812, %v760
        %826 = vst.msk [vmem:[%s218 + $0x34] sm:$0xf] %vm812, %v761
        %827 = vst.msk [vmem:[%s218 + $0x38] sm:$0xf] %vm812, %v762
        %828 = vst.msk [vmem:[%s218 + $0x3c] sm:$0xf] %vm812, %v763
        %829 = vst.msk [vmem:[%s218 + $0x40] sm:$0xf] %vm812, %v764
        %830 = vst.msk [vmem:[%s218 + $0x44] sm:$0xf] %vm812, %v765
        %831 = vst.msk [vmem:[%s218 + $0x48] sm:$0xf] %vm812, %v766
        %832 = vst.msk [vmem:[%s218 + $0x4c] sm:$0xf] %vm812, %v767
        %833 = vst.msk [vmem:[%s218 + $0x50] sm:$0xf] %vm812, %v768
        %834 = vst.msk [vmem:[%s218 + $0x54] sm:$0xf] %vm812, %v769
        %835 = vst.msk [vmem:[%s218 + $0x58] sm:$0xf] %vm812, %v770
        %836 = vst.msk [vmem:[%s218 + $0x5c] sm:$0xf] %vm812, %v771
        %837 = vst.msk [vmem:[%s218 + $0x60] sm:$0xf] %vm812, %v772
        %838 = vst.msk [vmem:[%s218 + $0x64] sm:$0xf] %vm812, %v773
        %839 = vst.msk [vmem:[%s218 + $0x68] sm:$0xf] %vm812, %v774
        %840 = vst.msk [vmem:[%s218 + $0x6c] sm:$0xf] %vm812, %v775
        %841 = vst.msk [vmem:[%s218 + $0x70] sm:$0xf] %vm812, %v776
        %842 = vst.msk [vmem:[%s218 + $0x74] sm:$0xf] %vm812, %v777
        %843 = vst.msk [vmem:[%s218 + $0x78] sm:$0xf] %vm812, %v778
        %844 = vst.msk [vmem:[%s218 + $0x7c] sm:$0xf] %vm812, %v779
        %s845 = smul.u32 32, %s18
        %p846 = scmp.lt.s32.totalorder %s845, 63
        %s847 = scalar_select %p846, %s845, 63
        %s848 = smul.addr %s847, 4
        %s849 = scalar_lea.vmem %s4, %s848
        // Predicated region
        $region41: #{tpu_custom_call.1} parent=35 // pred_check
          %p850 = pneg %p125
        $region42: #{tpu_custom_call.1} parent=35 // pred_check_branch
          %852 = sbr.rel (%p850) target = $region44
        $region43: #{tpu_custom_call.1} parent=35 // pred_region
          %s853 = smul.u32 32, %s18
        $region44: #{tpu_custom_call.1} parent=35 // pred_fallthru
          _
      $region36: #{tpu_custom_call.1} parent=5 // pred_fallthru
        _
      %p854 = scmp.le.s32.totalorder 2, %s13
      // Predicated region
      $region45: #{tpu_custom_call.1} parent=5 // pred_check
        %p855 = pneg %p854
      $region46: #{tpu_custom_call.1} parent=5 // pred_check_branch
        %857 = sbr.rel (%p855) target = $region48
      $region47: #{tpu_custom_call.1} parent=5 // pred_region
        %s858 = ssub.s32 %s13, 2
        // Predicated region
        $region49: #{tpu_custom_call.1} parent=47 // pred_check
          %p859 = pneg %p131
        $region50: #{tpu_custom_call.1} parent=47 // pred_check_branch
          %861 = sbr.rel (%p859) target = $region52
        $region51: #{tpu_custom_call.1} parent=47 // pred_region
          %s862 = smul.u32 32, %s19
          %p863 = scmp.lt.s32.totalorder %s862, 63
          %s864 = scalar_select %p863, %s862, 63
          %s865 = smul.addr %s864, 4
          %s866 = scalar_lea.vmem %s4, %s865
        $region52: #{tpu_custom_call.1} parent=47 // pred_fallthru
          _
      $region48: #{tpu_custom_call.1} parent=5 // pred_fallthru
        _
    $region6: #{tpu_custom_call.1} parent=1 // loop_footer
      %s17 = sadd.s32 1, %s13
    $region7: #{tpu_custom_call.1} parent=1 // loop_footer_branch
      %12 = sbr.rel target = $region3
    $region8: #{tpu_custom_call.1} parent=1 // loop_exit
      _
    %867 = vsyncpa [#allocation3], 1
    %s868 = scalar_lea.sflag [#allocation3], 1
    %869 = vsyncpa %s868, 1

</llo_original>
